<compile_context>
chip_gen: v6e
topology: v6e:2x2x1
jax: 0.10.0
libtpu: 0.0.40
codegen_flags: <defaults>
</compile_context>

<pallas_src>
import functools

import jax
import jax.numpy as jnp
from jax.experimental import pallas as pl
from jax.experimental.pallas import tpu as pltpu


def _round_up(x: int, m: int) -> int:
    return ((x + m - 1) // m) * m


# ----------------------------------------------------------------------------
# Fused MLP kernel: all layers in one body, intermediates stay on-chip.
# ----------------------------------------------------------------------------
def _fused_mlp_kernel(x_ref, w_ref, b_ref, o_ref, *,
                      n_layers: int, in_features: int, out_features: int):
    # x_ref : (tile, in_features) f32   activation tile, true (unpadded) width
    # w_ref : (L, P, P)  bf16           zero-padded, pre-transposed weights (resident)
    # b_ref : (L, 1, P)  f32            zero-padded biases (resident)
    # o_ref : (tile, out_features)      narrow output — padded lanes never hit HBM
    #
    # Layer 0 contracts over the true in_features only (static slice of the
    # padded weight block); zero padding elsewhere is exact for the forward.
    h = jnp.dot(x_ref[...].astype(jnp.bfloat16),
                w_ref[0, :in_features, :],
                preferred_element_type=jnp.float32)
    h = h + b_ref[0]                              # (1, P) broadcasts over rows
    for l in range(1, n_layers):                  # static, fully unrolled
        h = jnp.maximum(h, 0.0)                   # ReLU on all but the last layer
        h = jnp.dot(h.astype(jnp.bfloat16), w_ref[l],
                    preferred_element_type=jnp.float32)
        h = h + b_ref[l]
    o_ref[...] = h[:, :out_features].astype(o_ref.dtype)


# ----------------------------------------------------------------------------
# Parameter init (matches nn.Linear's default uniform(-1/sqrt(in), 1/sqrt(in)))
# ----------------------------------------------------------------------------
def init_qnet_params(nnformat, key):
    """Returns list of (W_t, b): W_t is (in, out) — PyTorch (out, in) transposed."""
    params = []
    for i in range(len(nnformat) - 1):
        fan_in, fan_out = nnformat[i], nnformat[i + 1]
        key, kw, kb = jax.random.split(key, 3)
        bound = 1.0 / (fan_in ** 0.5)
        w_t = jax.random.uniform(kw, (fan_in, fan_out), jnp.float32,
                                 minval=-bound, maxval=bound)
        b = jax.random.uniform(kb, (fan_out,), jnp.float32,
                               minval=-bound, maxval=bound)
        params.append((w_t, b))
    return params


def pack_qnet_params(params, nnformat):
    """Zero-pad every layer to a common lane-dense width P=round_up(max,128).

    Weights are packed in bf16 (MXU-native operands); biases stay f32.
    Zero padding is exact for the forward pass.
    Returns (w_stack (L, P, P) bf16, b_stack (L, 1, P) f32).
    """
    P = _round_up(max(nnformat), 128)
    L = len(params)
    w_stack = jnp.zeros((L, P, P), jnp.bfloat16)
    b_stack = jnp.zeros((L, 1, P), jnp.float32)
    for l, (w_t, b) in enumerate(params):
        k, n = w_t.shape
        w_stack = w_stack.at[l, :k, :n].set(w_t.astype(jnp.bfloat16))
        b_stack = b_stack.at[l, 0, :n].set(b.astype(jnp.float32))
    return w_stack, b_stack


# ----------------------------------------------------------------------------
# Forward wrapper: one fused pallas_call, batch-tiled grid, jitted.
# ----------------------------------------------------------------------------
def make_qnet_forward(nnformat, *, max_batch_tile: int = 512):
    n_layers = len(nnformat) - 1
    in_features = nnformat[0]
    out_features = nnformat[-1]
    P = _round_up(max(nnformat), 128)
    kernel = functools.partial(_fused_mlp_kernel, n_layers=n_layers,
                               in_features=in_features, out_features=out_features)

    @jax.jit
    def forward(x, w_stack, b_stack):
        m, k = x.shape
        assert k == in_features, (k, in_features)
        # Tile selection (static at trace time): padding bounded by a few rows,
        # and training-sized batches produce >1 grid steps for megacore split.
        n_tiles = pl.cdiv(m, max_batch_tile)
        tile = _round_up(pl.cdiv(m, n_tiles), 8)
        mp = tile * n_tiles
        xp = x if mp == m else jnp.pad(x, ((0, mp - m), (0, 0)))

        out = pl.pallas_call(
            kernel,
            out_shape=jax.ShapeDtypeStruct((mp, out_features), x.dtype),
            grid=(n_tiles,),
            in_specs=[
                # Activations at true feature width (block dim == array dim).
                pl.BlockSpec((tile, in_features), lambda i: (i, 0)),
                # Constant block index -> fetched once, resident across the grid.
                pl.BlockSpec((n_layers, P, P), lambda i: (0, 0, 0)),
                pl.BlockSpec((n_layers, 1, P), lambda i: (0, 0, 0)),
            ],
            out_specs=pl.BlockSpec((tile, out_features), lambda i: (i, 0)),
            compiler_params=pltpu.CompilerParams(
                dimension_semantics=("parallel",)),  # split over TCs on v7x
        )(xp, w_stack, b_stack)

        # Only padded batch rows to strip; feature dim is already exact.
        return out if mp == m else out[:m]

    return forward


# ----------------------------------------------------------------------------
# Pure-JAX references (unpadded params) for correctness checking.
# ----------------------------------------------------------------------------
def qnet_forward_ref(x, params):
    """PyTorch-exact f32 reference."""
    n_layers = len(params)
    for i, (w_t, b) in enumerate(params):
        x = x @ w_t + b
        if i < n_layers - 1:
            x = jnp.maximum(x, 0.0)
    return x


def qnet_forward_ref_bf16(x, params):
    """Reference mirroring kernel numerics: bf16 matmul operands, f32 accum."""
    n_layers = len(params)
    h = x
    for i, (w_t, b) in enumerate(params):
        h = jnp.dot(h.astype(jnp.bfloat16), w_t.astype(jnp.bfloat16),
                    preferred_element_type=jnp.float32) + b
        if i < n_layers - 1:
            h = jnp.maximum(h, 0.0)
    return h


if __name__ == "__main__":
    key = jax.random.PRNGKey(0)
    # Small MLP consistent with a snake-game qNet.
    nnformat = [16, 32, 32, 4]

    params = init_qnet_params(nnformat, key)
    w_stack, b_stack = pack_qnet_params(params, nnformat)
    forward = make_qnet_forward(nnformat)

    # Inference-sized batch.
    key, kx = jax.random.split(key)
    x = jax.random.normal(kx, (8, nnformat[0]), jnp.float32)
    out = jax.block_until_ready(forward(x, w_stack, b_stack))
    assert out.shape == (8, nnformat[-1]), out.shape
    assert jnp.allclose(out, qnet_forward_ref_bf16(x, params),
                        atol=1e-3, rtol=1e-3), "mismatch vs bf16-matched ref (batch=8)"
    assert jnp.allclose(out, qnet_forward_ref(x, params),
                        atol=5e-2, rtol=5e-2), "mismatch vs f32 ref (batch=8)"

    # Odd batch exercises the batch-row padding path.
    key, kx2 = jax.random.split(key)
    x2 = jax.random.normal(kx2, (37, nnformat[0]), jnp.float32)
    out2 = jax.block_until_ready(forward(x2, w_stack, b_stack))
    assert out2.shape == (37, nnformat[-1]), out2.shape
    assert jnp.allclose(out2, qnet_forward_ref_bf16(x2, params),
                        atol=1e-3, rtol=1e-3), "mismatch vs bf16-matched ref (batch=37)"
    assert jnp.allclose(out2, qnet_forward_ref(x2, params),
                        atol=5e-2, rtol=5e-2), "mismatch vs f32 ref (batch=37)"

    # Replay-buffer-sized batch exercises the multi-tile parallel grid.
    key, kx3 = jax.random.split(key)
    x3 = jax.random.normal(kx3, (1061, nnformat[0]), jnp.float32)
    out3 = jax.block_until_ready(forward(x3, w_stack, b_stack))
    assert out3.shape == (1061, nnformat[-1]), out3.shape
    assert jnp.allclose(out3, qnet_forward_ref_bf16(x3, params),
                        atol=1e-3, rtol=1e-3), "mismatch vs bf16-matched ref (batch=1061)"
    assert jnp.allclose(out3, qnet_forward_ref(x3, params),
                        atol=5e-2, rtol=5e-2), "mismatch vs f32 ref (batch=1061)"

    print("KERNEL_OK")
</pallas_src>

<mosaic_0001>
module attributes {stable_mosaic.version = 11 : i64} {
  func.func @_fused_mlp_kernel(%arg0: i32, %arg1: memref<8x16xf32, #tpu.memory_space<vmem>>, %arg2: memref<3x128x128xbf16, #tpu.memory_space<vmem>>, %arg3: memref<3x1x128xf32, #tpu.memory_space<vmem>>, %arg4: memref<8x4xf32, #tpu.memory_space<vmem>>) attributes {dimension_semantics = [#tpu.dimension_semantics<parallel>], iteration_bounds = array<i64: 1>, scalar_prefetch = 0 : i64, scratch_operands = 0 : i64, tpu.core_type = #tpu.core_type<tc>, window_params = [{transform_indices = @transform_0, window_bounds = array<i64: 8, 16>}, {pipeline_mode = #tpu.pipeline_mode<synchronous>, transform_indices = @transform_1, window_bounds = array<i64: 3, 128, 128>}, {pipeline_mode = #tpu.pipeline_mode<synchronous>, transform_indices = @transform_2, window_bounds = array<i64: 3, 1, 128>}, {transform_indices = @transform_3, window_bounds = array<i64: 8, 4>}]} {
    %c0 = arith.constant 0 : index
    %c0_0 = arith.constant 0 : index
    %0 = vector.load %arg1[%c0, %c0_0] : memref<8x16xf32, #tpu.memory_space<vmem>>, vector<8x16xf32>
    %1 = arith.truncf %0 : vector<8x16xf32> to vector<8x16xbf16>
    %c0_1 = arith.constant 0 : index
    %c0_2 = arith.constant 0 : index
    %c0_3 = arith.constant 0 : index
    %2 = vector.load %arg2[%c0_1, %c0_2, %c0_3] : memref<3x128x128xbf16, #tpu.memory_space<vmem>>, vector<1x16x128xbf16>
    %3 = vector.shape_cast %2 : vector<1x16x128xbf16> to vector<16x128xbf16>
    %cst = arith.constant dense<0.000000e+00> : vector<8x128xf32>
    %4 = tpu.matmul %1, %3, %cst {dimension_numbers = #tpu.dot_dimension_numbers<[1], [0], [0], [1], [0, 0, 1, 1], [], []>} : vector<8x16xbf16>, vector<16x128xbf16>, vector<8x128xf32> -> vector<8x128xf32>
    %c0_4 = arith.constant 0 : index
    %c0_5 = arith.constant 0 : index
    %c0_6 = arith.constant 0 : index
    %5 = vector.load %arg3[%c0_4, %c0_5, %c0_6] : memref<3x1x128xf32, #tpu.memory_space<vmem>>, vector<1x1x128xf32>
    %6 = vector.shape_cast %5 : vector<1x1x128xf32> to vector<1x128xf32>
    %7 = vector.broadcast %6 : vector<1x128xf32> to vector<8x128xf32>
    %8 = arith.addf %4, %7 : vector<8x128xf32>
    %cst_7 = arith.constant 0.000000e+00 : f32
    %9 = vector.broadcast %cst_7 : f32 to vector<8x128xf32>
    %10 = arith.maximumf %8, %9 : vector<8x128xf32>
    %11 = arith.truncf %10 : vector<8x128xf32> to vector<8x128xbf16>
    %c1 = arith.constant 1 : index
    %c0_8 = arith.constant 0 : index
    %c0_9 = arith.constant 0 : index
    %12 = vector.load %arg2[%c1, %c0_8, %c0_9] : memref<3x128x128xbf16, #tpu.memory_space<vmem>>, vector<1x128x128xbf16>
    %13 = vector.shape_cast %12 : vector<1x128x128xbf16> to vector<128x128xbf16>
    %cst_10 = arith.constant dense<0.000000e+00> : vector<8x128xf32>
    %14 = tpu.matmul %11, %13, %cst_10 {dimension_numbers = #tpu.dot_dimension_numbers<[1], [0], [0], [1], [0, 0, 1, 1], [], []>} : vector<8x128xbf16>, vector<128x128xbf16>, vector<8x128xf32> -> vector<8x128xf32>
    %c1_11 = arith.constant 1 : index
    %c0_12 = arith.constant 0 : index
    %c0_13 = arith.constant 0 : index
    %15 = vector.load %arg3[%c1_11, %c0_12, %c0_13] : memref<3x1x128xf32, #tpu.memory_space<vmem>>, vector<1x1x128xf32>
    %16 = vector.shape_cast %15 : vector<1x1x128xf32> to vector<1x128xf32>
    %17 = vector.broadcast %16 : vector<1x128xf32> to vector<8x128xf32>
    %18 = arith.addf %14, %17 : vector<8x128xf32>
    %cst_14 = arith.constant 0.000000e+00 : f32
    %19 = vector.broadcast %cst_14 : f32 to vector<8x128xf32>
    %20 = arith.maximumf %18, %19 : vector<8x128xf32>
    %21 = arith.truncf %20 : vector<8x128xf32> to vector<8x128xbf16>
    %c2 = arith.constant 2 : index
    %c0_15 = arith.constant 0 : index
    %c0_16 = arith.constant 0 : index
    %22 = vector.load %arg2[%c2, %c0_15, %c0_16] : memref<3x128x128xbf16, #tpu.memory_space<vmem>>, vector<1x128x128xbf16>
    %23 = vector.shape_cast %22 : vector<1x128x128xbf16> to vector<128x128xbf16>
    %cst_17 = arith.constant dense<0.000000e+00> : vector<8x128xf32>
    %24 = tpu.matmul %21, %23, %cst_17 {dimension_numbers = #tpu.dot_dimension_numbers<[1], [0], [0], [1], [0, 0, 1, 1], [], []>} : vector<8x128xbf16>, vector<128x128xbf16>, vector<8x128xf32> -> vector<8x128xf32>
    %c2_18 = arith.constant 2 : index
    %c0_19 = arith.constant 0 : index
    %c0_20 = arith.constant 0 : index
    %25 = vector.load %arg3[%c2_18, %c0_19, %c0_20] : memref<3x1x128xf32, #tpu.memory_space<vmem>>, vector<1x1x128xf32>
    %26 = vector.shape_cast %25 : vector<1x1x128xf32> to vector<1x128xf32>
    %27 = vector.broadcast %26 : vector<1x128xf32> to vector<8x128xf32>
    %28 = arith.addf %24, %27 : vector<8x128xf32>
    %29 = vector.extract_strided_slice %28 {offsets = [0, 0], sizes = [8, 4], strides = [1, 1]} : vector<8x128xf32> to vector<8x4xf32>
    %c0_21 = arith.constant 0 : index
    %c0_22 = arith.constant 0 : index
    %30 = vector.load %arg4[%c0_21, %c0_22] : memref<8x4xf32, #tpu.memory_space<vmem>>, vector<8x4xf32>
    tpu.vector_store %arg4[%c0_21, %c0_22], %29 {strides = array<i32>} : memref<8x4xf32, #tpu.memory_space<vmem>>, vector<8x4xf32>,
    return
  }
  func.func @transform_0(%arg0: i32) -> (i32, i32) {
    %c0_i32 = arith.constant 0 : i32
    %c0_i32_0 = arith.constant 0 : i32
    return %arg0, %c0_i32 : i32, i32
  }
  func.func @transform_1(%arg0: i32) -> (i32, i32, i32) {
    %c0_i32 = arith.constant 0 : i32
    %c0_i32_0 = arith.constant 0 : i32
    %c0_i32_1 = arith.constant 0 : i32
    %c0_i32_2 = arith.constant 0 : i32
    return %c0_i32, %c0_i32_0, %c0_i32_1 : i32, i32, i32
  }
  func.func @transform_2(%arg0: i32) -> (i32, i32, i32) {
    %c0_i32 = arith.constant 0 : i32
    %c0_i32_0 = arith.constant 0 : i32
    %c0_i32_1 = arith.constant 0 : i32
    %c0_i32_2 = arith.constant 0 : i32
    return %c0_i32, %c0_i32_0, %c0_i32_1 : i32, i32, i32
  }
  func.func @transform_3(%arg0: i32) -> (i32, i32) {
    %c0_i32 = arith.constant 0 : i32
    %c0_i32_0 = arith.constant 0 : i32
    return %arg0, %c0_i32 : i32, i32
  }
}

</mosaic_0001>

<llo_original>
// kernel: forward.1
$region0: #{forward.1}
  #allocation0 [shape = 'u32[]', space=smem, size = 0x4, offset = 0x4, fixed_abs, tag = 'smem constant byte address 0x4 - core index']
  #allocation1 [shape = 'u32[144,128]{1,0:T(1,128)}', space=vmem, size = 0x12000, scoped, tag = 'internal scratch']
  %s0 = inlined_call_operand.hbm [shape: f32[8,16], index: 0, kind: input, shape index: {}]
  %s1 = inlined_call_operand.hbm [shape: bf16[3,128,128], index: 1, kind: input, shape index: {}]
  %s2 = inlined_call_operand.vmem [shape: f32[3,1,128], index: 2, kind: input, shape index: {}]
  %s3 = inlined_call_operand.vmem [shape: f32[8,4], index: 3, kind: output, shape index: {}]
  %s4 = sld [smem:[#allocation0]]
  $region30: #{forward.1} parent=0
    _
  %s6 = ssub.s32 1, %s4
  %s7 = scalar_select 0, %s6, %s4
  $region1: #{forward.1} parent=0
    #allocation2 [shape = 'u8[4096]{0}', space=vmem, size = 0x1000, scoped, tag = 'input window, operand 0, single buffered']
    #allocation3 [shape = 's32[1]{0}', space=sflag, size = 0x4, scoped, tag = 'scoped memory for forward.1']
    #allocation4 [shape = 'u8[98304]{0}', space=vmem, size = 0x18000, scoped, tag = 'input window, operand 1, single buffered']
    #allocation5 [shape = 's32[1]{0}', space=sflag, size = 0x4, scoped, tag = 'scoped memory for forward.1']
    %8 = vsyncpa [#allocation3], 0
    %9 = vsyncpa [#allocation5], 0
    // Predicated region
    $region2: #{forward.1} parent=1 // pred_check
      _
    $region3: #{forward.1} parent=1 // pred_check_branch
      %11 = sbr.rel (0) target = $region5
    $region4: #{forward.1} parent=1 // pred_region
      %s13 = ssub.s32 128, 128
      %14 = vsyncadd [#allocation3], %s13
      %s16 = sshll.u32 [#allocation2], 4
      %s17 = int_to_ptr.vmem [resolvable:$true] %s16
      %19 = dma.hbm_to_vmem [thread:$0]  %s0, 128, %s17, [#allocation3]
    $region5: #{forward.1} parent=1 // pred_fallthru
      _
    // Predicated region
    $region6: #{forward.1} parent=1 // pred_check
      _
    $region7: #{forward.1} parent=1 // pred_check_branch
      %21 = sbr.rel (0) target = $region9
    $region8: #{forward.1} parent=1 // pred_region
      %s23 = ssub.s32 3072, 3072
      %24 = vsyncadd [#allocation5], %s23
      %s25 = sshll.u32 [#allocation4], 4
      %s26 = int_to_ptr.vmem [resolvable:$true] %s25
      %31 = dma.hbm_to_vmem [thread:$0]  %s1, 3072, %s26, [#allocation5], 64, 64, 4
    $region9: #{forward.1} parent=1 // pred_fallthru
      _
    // Predicated region
    $region10: #{forward.1} parent=1 // pred_check
      _
    $region11: #{forward.1} parent=1 // pred_check_branch
      %33 = sbr.rel (0) target = $region13
    $region12: #{forward.1} parent=1 // pred_region
      _
    $region13: #{forward.1} parent=1 // pred_fallthru
      _
    // Predicated region
    $region14: #{forward.1} parent=1 // pred_check
      _
    $region15: #{forward.1} parent=1 // pred_check_branch
      %35 = sbr.rel (0) target = $region17
    $region16: #{forward.1} parent=1 // pred_region
      %36 = dma.done [#allocation3], 128
    $region17: #{forward.1} parent=1 // pred_fallthru
      _
    // Predicated region
    $region18: #{forward.1} parent=1 // pred_check
      _
    $region19: #{forward.1} parent=1 // pred_check_branch
      %38 = sbr.rel (0) target = $region21
    $region20: #{forward.1} parent=1 // pred_region
      %39 = dma.done [#allocation5], 3072
    $region21: #{forward.1} parent=1 // pred_fallthru
      _
    %v41 = vld [vmem:[#allocation2] sm:$0xff]
    %v42 = vpack.c.bf16 %v41, %v41
    %v43 = vld [vmem:[#allocation4] sm:$0xf]
    %v44 = vld [vmem:[#allocation4 + $0x4] sm:$0xf]
    %v45 = vld [vmem:[%s2] sm:$0x1]
    %v47 = vlaneseq
    %v48 = vshrl.u32 %v47, 7
    %v49 = vsub.s32 0, %v48
    %v50 = vrot.slane %v45, %v49
    %v54 = vunpack.c.l.b16 %v43
    %v55 = vunpack.c.l.b16 %v44
    %v56 = vpack.c.b16 %v55, %v54
    %vm58 = vcmask 130048
    %v60 = vsel %vm58, %v42, 0
    %62 = vmatprep.subr.bf16.mxu0 0
    %63 = vmatpush1.bf16.msra.mxu0 0
    %64 = vmatprep.subr.bf16.mxu0 0
    %65 = vmatpush1.bf16.msra.mxu0 0
    %66 = vmatprep.subr.bf16.mxu0 0
    %67 = vmatpush1.bf16.msra.mxu0 0
    %68 = vmatprep.subr.bf16.mxu0 0
    %69 = vmatpush1.bf16.msra.mxu0 0
    %70 = vmatprep.subr.bf16.mxu0 0
    %71 = vmatpush1.bf16.msra.mxu0 0
    %72 = vmatprep.subr.bf16.mxu0 0
    %73 = vmatpush1.bf16.msra.mxu0 0
    %74 = vmatprep.subr.bf16.mxu0 0
    %75 = vmatpush1.bf16.msra.mxu0 0
    %76 = vmatprep.subr.bf16.mxu0 0
    %77 = vmatpush1.bf16.msra.mxu0 %v56
    %78 = vmatprep.subr.bf16.mxu0 0
    %79 = vmatpush2.bf16.msra.mxu0 0
    %80 = vmatprep.subr.bf16.mxu0 0
    %81 = vmatpush2.bf16.msra.mxu0 0
    %82 = vmatprep.subr.bf16.mxu0 0
    %83 = vmatpush2.bf16.msra.mxu0 0
    %84 = vmatprep.subr.bf16.mxu0 0
    %85 = vmatpush2.bf16.msra.mxu0 0
    %86 = vmatprep.subr.bf16.mxu0 0
    %87 = vmatpush2.bf16.msra.mxu0 0
    %88 = vmatprep.subr.bf16.mxu0 0
    %89 = vmatpush2.bf16.msra.mxu0 0
    %90 = vmatprep.subr.bf16.mxu0 0
    %91 = vmatpush2.bf16.msra.mxu0 0
    %92 = vmatprep.subr.bf16.mxu0 0
    %93 = vmatpush2.bf16.msra.mxu0 0
    %94 = vmatprep.mubr.bf16.mxu0 0
    %95 = vmatmul.mubr.bf16.gmra.mxu0 %v60
    %v96 = vpop.f32.mrf.mxu0
    %v97 = vadd.f32 %v50, %v96
    %v98 = vpop.f32.mrf.mxu0
    %v99 = vpop.f32.mrf.mxu0
    %v100 = vpop.f32.mrf.mxu0
    %101 = vdwg.mxu0
    %v102 = vmax.f32 %v97, 0.0
    %v103 = vpack.c.bf16 %v102, %v102
    %s104 = scalar_lea.vmem [#allocation4], 64
    %v105 = vld [vmem:[%s104] sm:$0xf]
    %v106 = vld [vmem:[%s104 + $0x4] sm:$0xf]
    %v107 = vld [vmem:[%s104 + $0x8] sm:$0xf]
    %v108 = vld [vmem:[%s104 + $0xc] sm:$0xf]
    %v109 = vld [vmem:[%s104 + $0x10] sm:$0xf]
    %v110 = vld [vmem:[%s104 + $0x14] sm:$0xf]
    %v111 = vld [vmem:[%s104 + $0x18] sm:$0xf]
    %v112 = vld [vmem:[%s104 + $0x1c] sm:$0xf]
    %v113 = vld [vmem:[%s104 + $0x20] sm:$0xf]
    %v114 = vld [vmem:[%s104 + $0x24] sm:$0xf]
    %v115 = vld [vmem:[%s104 + $0x28] sm:$0xf]
    %v116 = vld [vmem:[%s104 + $0x2c] sm:$0xf]
    %v117 = vld [vmem:[%s104 + $0x30] sm:$0xf]
    %v118 = vld [vmem:[%s104 + $0x34] sm:$0xf]
    %v119 = vld [vmem:[%s104 + $0x38] sm:$0xf]
    %v120 = vld [vmem:[%s104 + $0x3c] sm:$0xf]
    %s121 = scalar_lea.vmem %s2, 1
    %v122 = vld [vmem:[%s121] sm:$0x1]
    %v124 = vlaneseq
    %v125 = vshrl.u32 %v124, 7
    %v126 = vsub.s32 0, %v125
    %v127 = vrot.slane %v122, %v126
    %v145 = vunpack.c.l.b16 %v105
    %v146 = vunpack.c.l.b16 %v106
    %v147 = vunpack.c.l.b16 %v107
    %v148 = vunpack.c.l.b16 %v108
    %v149 = vunpack.c.l.b16 %v109
    %v150 = vunpack.c.l.b16 %v110
    %v151 = vunpack.c.l.b16 %v111
    %v152 = vunpack.c.l.b16 %v112
    %v153 = vunpack.c.l.b16 %v113
    %v154 = vunpack.c.l.b16 %v114
    %v155 = vunpack.c.l.b16 %v115
    %v156 = vunpack.c.l.b16 %v116
    %v157 = vunpack.c.l.b16 %v117
    %v158 = vunpack.c.l.b16 %v118
    %v159 = vunpack.c.l.b16 %v119
    %v160 = vunpack.c.l.b16 %v120
    %v161 = vpack.c.b16 %v146, %v145
    %v162 = vpack.c.b16 %v148, %v147
    %v163 = vpack.c.b16 %v150, %v149
    %v164 = vpack.c.b16 %v152, %v151
    %v165 = vpack.c.b16 %v154, %v153
    %v166 = vpack.c.b16 %v156, %v155
    %v167 = vpack.c.b16 %v158, %v157
    %v168 = vpack.c.b16 %v160, %v159
    %177 = vmatprep.subr.bf16.mxu0 0
    %178 = vmatpush1.bf16.msra.mxu0 %v168
    %179 = vmatprep.subr.bf16.mxu0 0
    %180 = vmatpush1.bf16.msra.mxu0 %v167
    %181 = vmatprep.subr.bf16.mxu0 0
    %182 = vmatpush1.bf16.msra.mxu0 %v166
    %183 = vmatprep.subr.bf16.mxu0 0
    %184 = vmatpush1.bf16.msra.mxu0 %v165
    %185 = vmatprep.subr.bf16.mxu0 0
    %186 = vmatpush1.bf16.msra.mxu0 %v164
    %187 = vmatprep.subr.bf16.mxu0 0
    %188 = vmatpush1.bf16.msra.mxu0 %v163
    %189 = vmatprep.subr.bf16.mxu0 0
    %190 = vmatpush1.bf16.msra.mxu0 %v162
    %191 = vmatprep.subr.bf16.mxu0 0
    %192 = vmatpush1.bf16.msra.mxu0 %v161
    %193 = vmatprep.subr.bf16.mxu0 0
    %194 = vmatpush2.bf16.msra.mxu0 0
    %195 = vmatprep.subr.bf16.mxu0 0
    %196 = vmatpush2.bf16.msra.mxu0 0
    %197 = vmatprep.subr.bf16.mxu0 0
    %198 = vmatpush2.bf16.msra.mxu0 0
    %199 = vmatprep.subr.bf16.mxu0 0
    %200 = vmatpush2.bf16.msra.mxu0 0
    %201 = vmatprep.subr.bf16.mxu0 0
    %202 = vmatpush2.bf16.msra.mxu0 0
    %203 = vmatprep.subr.bf16.mxu0 0
    %204 = vmatpush2.bf16.msra.mxu0 0
    %205 = vmatprep.subr.bf16.mxu0 0
    %206 = vmatpush2.bf16.msra.mxu0 0
    %207 = vmatprep.subr.bf16.mxu0 0
    %208 = vmatpush2.bf16.msra.mxu0 0
    %209 = vmatprep.mubr.bf16.mxu0 0
    %210 = vmatmul.mubr.bf16.gmra.mxu0 %v103
    %v211 = vpop.f32.mrf.mxu0
    %v212 = vadd.f32 %v127, %v211
    %v213 = vpop.f32.mrf.mxu0
    %v214 = vpop.f32.mrf.mxu0
    %v215 = vpop.f32.mrf.mxu0
    %216 = vdwg.mxu0
    %v217 = vmax.f32 %v212, 0.0
    %v218 = vpack.c.bf16 %v217, %v217
    %s219 = scalar_lea.vmem [#allocation4], 128
    %v220 = vld [vmem:[%s219] sm:$0xf]
    %v221 = vld [vmem:[%s219 + $0x4] sm:$0xf]
    %v222 = vld [vmem:[%s219 + $0x8] sm:$0xf]
    %v223 = vld [vmem:[%s219 + $0xc] sm:$0xf]
    %v224 = vld [vmem:[%s219 + $0x10] sm:$0xf]
    %v225 = vld [vmem:[%s219 + $0x14] sm:$0xf]
    %v226 = vld [vmem:[%s219 + $0x18] sm:$0xf]
    %v227 = vld [vmem:[%s219 + $0x1c] sm:$0xf]
    %v228 = vld [vmem:[%s219 + $0x20] sm:$0xf]
    %v229 = vld [vmem:[%s219 + $0x24] sm:$0xf]
    %v230 = vld [vmem:[%s219 + $0x28] sm:$0xf]
    %v231 = vld [vmem:[%s219 + $0x2c] sm:$0xf]
    %v232 = vld [vmem:[%s219 + $0x30] sm:$0xf]
    %v233 = vld [vmem:[%s219 + $0x34] sm:$0xf]
    %v234 = vld [vmem:[%s219 + $0x38] sm:$0xf]
    %v235 = vld [vmem:[%s219 + $0x3c] sm:$0xf]
    %s236 = scalar_lea.vmem %s2, 2
    %v237 = vld [vmem:[%s236] sm:$0x1]
    %v239 = vlaneseq
    %v240 = vshrl.u32 %v239, 7
    %v241 = vsub.s32 0, %v240
    %v242 = vrot.slane %v237, %v241
    %v260 = vunpack.c.l.b16 %v220
    %v261 = vunpack.c.l.b16 %v221
    %v262 = vunpack.c.l.b16 %v222
    %v263 = vunpack.c.l.b16 %v223
    %v264 = vunpack.c.l.b16 %v224
    %v265 = vunpack.c.l.b16 %v225
    %v266 = vunpack.c.l.b16 %v226
    %v267 = vunpack.c.l.b16 %v227
    %v268 = vunpack.c.l.b16 %v228
    %v269 = vunpack.c.l.b16 %v229
    %v270 = vunpack.c.l.b16 %v230
    %v271 = vunpack.c.l.b16 %v231
    %v272 = vunpack.c.l.b16 %v232
    %v273 = vunpack.c.l.b16 %v233
    %v274 = vunpack.c.l.b16 %v234
    %v275 = vunpack.c.l.b16 %v235
    %v276 = vpack.c.b16 %v261, %v260
    %v277 = vpack.c.b16 %v263, %v262
    %v278 = vpack.c.b16 %v265, %v264
    %v279 = vpack.c.b16 %v267, %v266
    %v280 = vpack.c.b16 %v269, %v268
    %v281 = vpack.c.b16 %v271, %v270
    %v282 = vpack.c.b16 %v273, %v272
    %v283 = vpack.c.b16 %v275, %v274
    %292 = vmatprep.subr.bf16.mxu0 0
    %293 = vmatpush1.bf16.msra.mxu0 %v283
    %294 = vmatprep.subr.bf16.mxu0 0
    %295 = vmatpush1.bf16.msra.mxu0 %v282
    %296 = vmatprep.subr.bf16.mxu0 0
    %297 = vmatpush1.bf16.msra.mxu0 %v281
    %298 = vmatprep.subr.bf16.mxu0 0
    %299 = vmatpush1.bf16.msra.mxu0 %v280
    %300 = vmatprep.subr.bf16.mxu0 0
    %301 = vmatpush1.bf16.msra.mxu0 %v279
    %302 = vmatprep.subr.bf16.mxu0 0
    %303 = vmatpush1.bf16.msra.mxu0 %v278
    %304 = vmatprep.subr.bf16.mxu0 0
    %305 = vmatpush1.bf16.msra.mxu0 %v277
    %306 = vmatprep.subr.bf16.mxu0 0
    %307 = vmatpush1.bf16.msra.mxu0 %v276
    %308 = vmatprep.subr.bf16.mxu0 0
    %309 = vmatpush2.bf16.msra.mxu0 0
    %310 = vmatprep.subr.bf16.mxu0 0
    %311 = vmatpush2.bf16.msra.mxu0 0
    %312 = vmatprep.subr.bf16.mxu0 0
    %313 = vmatpush2.bf16.msra.mxu0 0
    %314 = vmatprep.subr.bf16.mxu0 0
    %315 = vmatpush2.bf16.msra.mxu0 0
    %316 = vmatprep.subr.bf16.mxu0 0
    %317 = vmatpush2.bf16.msra.mxu0 0
    %318 = vmatprep.subr.bf16.mxu0 0
    %319 = vmatpush2.bf16.msra.mxu0 0
    %320 = vmatprep.subr.bf16.mxu0 0
    %321 = vmatpush2.bf16.msra.mxu0 0
    %322 = vmatprep.subr.bf16.mxu0 0
    %323 = vmatpush2.bf16.msra.mxu0 0
    %324 = vmatprep.mubr.bf16.mxu0 0
    %325 = vmatmul.mubr.bf16.gmra.mxu0 %v218
    %v326 = vpop.f32.mrf.mxu0
    %v327 = vadd.f32 %v242, %v326
    %v328 = vpop.f32.mrf.mxu0
    %v329 = vpop.f32.mrf.mxu0
    %v330 = vpop.f32.mrf.mxu0
    %331 = vdwg.mxu0
    %vm332 = vcmask 31744
    %333 = vst.msk [vmem:[%s3] sm:$0xff] %vm332, %v327
    // Predicated region
    $region22: #{forward.1} parent=1 // pred_check
      _
    $region23: #{forward.1} parent=1 // pred_check_branch
      %335 = sbr.rel (0) target = $region25
    $region24: #{forward.1} parent=1 // pred_region
      _
    $region25: #{forward.1} parent=1 // pred_fallthru
      _
    // Predicated region
    $region26: #{forward.1} parent=1 // pred_check
      _
    $region27: #{forward.1} parent=1 // pred_check_branch
      %337 = sbr.rel (0) target = $region29
    $region28: #{forward.1} parent=1 // pred_region
      _
    $region29: #{forward.1} parent=1 // pred_fallthru
      _
    %338 = vsyncpa [#allocation3], 1
    %339 = vsyncpa [#allocation5], 1

</llo_original>
